<compile_context>
chip_gen: v6e
topology: v6e:2x2x1
jax: 0.10.0
libtpu: 0.0.40
codegen_flags: <defaults>
</compile_context>

<pallas_src>
import functools

import jax
import jax.numpy as jnp
import numpy as np
from jax.experimental import pallas as pl
from jax.experimental.pallas import tpu as pltpu


# --------------------------------------------------------------------------- #
# Kernel
# --------------------------------------------------------------------------- #
def _gap_kernel(x_ref, o_ref, acc_ref, *, hw, hw_tile, ragged, inv_hw, use_mxu):
    """x_ref: (row_tile, hw_tile), o_ref: (row_tile, 1), acc_ref: f32 scratch."""
    k = pl.program_id(1)  # reduction step along H*W

    @pl.when(k == 0)
    def _init():
        acc_ref[...] = jnp.zeros_like(acc_ref)

    x = x_ref[...]  # (row_tile, hw_tile), input dtype
    if ragged:
        # Ragged last spatial tile: zero out lanes beyond the valid H*W extent.
        lane = jax.lax.broadcasted_iota(jnp.int32, x.shape, dimension=1)
        valid = (k * hw_tile + lane) < hw
        x = jnp.where(valid, x, jnp.zeros_like(x))

    if use_mxu:
        # bf16 (etc.) path: MXU ones-dot -> exact f32 accumulation, no f32 copy
        # of the tile and no VPU cast cost (matters on v5e's no-bf16 VPU).
        ones = jnp.ones((x.shape[-1], 1), x.dtype)
        part = jnp.dot(x, ones, preferred_element_type=jnp.float32)
    else:
        # f32 path: exact cross-lane sum (cast is a no-op).
        part = jnp.sum(x.astype(jnp.float32), axis=-1, keepdims=True)

    acc_ref[...] += part

    @pl.when(k == pl.num_programs(1) - 1)
    def _finalize():
        o_ref[...] = (acc_ref[...] * inv_hw).astype(o_ref.dtype)


# --------------------------------------------------------------------------- #
# Tile / VMEM planning
# --------------------------------------------------------------------------- #
def _round_up(x, m):
    return (x + m - 1) // m * m


def _vmem_capacity_bytes():
    try:
        cap = getattr(pltpu.get_tpu_info(), "vmem_capacity_bytes", None)
        if cap:
            return int(cap)
    except Exception:
        pass
    # Conservative fallback: v7x per-TensorCore VMEM (fits every generation).
    return 64 * 1024 * 1024


def _plan_tiles(R, HW, itemsize):
    """Pick (row_tile, hw_tile, vmem_limit_bytes) with padding-aware accounting."""
    cap = _vmem_capacity_bytes()
    # ~75% of physical VMEM, capped: v7x(64MiB) -> 48MiB, v5e/v6e(128MiB) -> 96MiB.
    total_budget = max(32 << 20, min((cap * 3) // 4, 96 << 20))
    # The input stream is double-buffered by the pipeline; leave ~2 MiB of
    # headroom for the (tiny) output block, accumulator scratch and internals.
    per_block = max((total_budget - (2 << 20)) // 2, 1 << 20)

    # Sublane padding granularity of the second-to-last block dim for this dtype.
    sub = 8 * (4 // itemsize) if itemsize <= 4 else 8  # f32:8, bf16:16, int8:32
    hw_padded_full = _round_up(HW, 128)                # lane padding of full H*W

    if sub * hw_padded_full * itemsize <= per_block:
        # A full-H*W strip of `sub` rows fits: one reduction step per row tile.
        hw_tile = HW
        rows_fit = per_block // (hw_padded_full * itemsize)
        row_tile = max(sub, (rows_fit // sub) * sub)
    else:
        # Huge spatial extent: tile H*W in 128-lane multiples, `sub` rows/block.
        hw_tile = max(128, (per_block // (sub * itemsize)) // 128 * 128)
        row_tile = sub

    if row_tile >= R:
        row_tile = R  # block dim equal to the full array dim is always legal
    return row_tile, hw_tile, total_budget


# --------------------------------------------------------------------------- #
# Wrapper
# --------------------------------------------------------------------------- #
def global_avg_pool2d(x_nchw):
    """PyTorch GlobalAvgPool2d forward: (B, C, H, W) -> (B, C)."""
    B, C, H, W = x_nchw.shape
    HW = H * W
    R = B * C
    x2d = x_nchw.reshape(R, HW)  # contiguous collapse for NCHW: no data movement

    itemsize = jnp.dtype(x_nchw.dtype).itemsize
    row_tile, hw_tile, vmem_limit = _plan_tiles(R, HW, itemsize)

    n_row = pl.cdiv(R, row_tile)
    n_hw = pl.cdiv(HW, hw_tile)
    ragged = (HW % hw_tile) != 0
    use_mxu = bool(jnp.issubdtype(x_nchw.dtype, jnp.floating) and itemsize < 4)

    kernel = functools.partial(
        _gap_kernel,
        hw=HW,
        hw_tile=hw_tile,
        ragged=ragged,
        inv_hw=1.0 / float(HW),
        use_mxu=use_mxu,
    )

    out2d = pl.pallas_call(
        kernel,
        out_shape=jax.ShapeDtypeStruct((R, 1), x_nchw.dtype),
        grid=(n_row, n_hw),
        in_specs=[pl.BlockSpec((row_tile, hw_tile), lambda r, k: (r, k))],
        out_specs=pl.BlockSpec((row_tile, 1), lambda r, k: (r, 0)),
        scratch_shapes=[pltpu.VMEM((row_tile, 1), jnp.float32)],
        compiler_params=pltpu.CompilerParams(
            dimension_semantics=("parallel", "arbitrary"),
            vmem_limit_bytes=vmem_limit,
        ),
        cost_estimate=pl.CostEstimate(
            flops=R * HW,
            transcendentals=0,
            bytes_accessed=R * HW * itemsize + R * itemsize,
        ),
    )(x2d)

    return out2d.reshape(B, C)


# --------------------------------------------------------------------------- #
# Self-test
# --------------------------------------------------------------------------- #
if __name__ == "__main__":
    B, C, H, W = 2, 4, 16, 16
    key = jax.random.PRNGKey(0)
    x = jax.random.normal(key, (B, C, H, W), jnp.float32)

    out = jax.block_until_ready(global_avg_pool2d(x))
    assert out.shape == (B, C), out.shape

    ref = jax.block_until_ready(jnp.mean(x, axis=(2, 3)))
    np.testing.assert_allclose(np.asarray(out), np.asarray(ref),
                               rtol=1e-5, atol=1e-5)
    print("KERNEL_OK")
</pallas_src>

<mosaic_0001>
module attributes {stable_mosaic.version = 11 : i64} {
  func.func @_gap_kernel(%arg0: i32, %arg1: i32, %arg2: memref<8x256xf32, #tpu.memory_space<vmem>>, %arg3: memref<8x1xf32, #tpu.memory_space<vmem>>, %arg4: memref<8x1xf32, #tpu.memory_space<vmem>>) attributes {dimension_semantics = [#tpu.dimension_semantics<parallel>, #tpu.dimension_semantics<arbitrary>], iteration_bounds = array<i64: 1, 1>, scalar_prefetch = 0 : i64, scratch_operands = 1 : i64, tpu.core_type = #tpu.core_type<tc>, window_params = [{transform_indices = @transform_0, window_bounds = array<i64: 8, 256>}, {transform_indices = @transform_1, window_bounds = array<i64: 8, 1>}]} {
    %c0_i32 = arith.constant 0 : i32
    %0 = arith.cmpi eq, %arg1, %c0_i32 : i32
    %1 = arith.extui %0 : i1 to i32
    %c0_i32_0 = arith.constant 0 : i32
    %2 = arith.cmpi ne, %1, %c0_i32_0 : i32
    scf.if %2 {
      %cst_8 = arith.constant 0.000000e+00 : f32
      %12 = vector.broadcast %cst_8 : f32 to vector<8x1xf32>
      %c0_9 = arith.constant 0 : index
      %c0_10 = arith.constant 0 : index
      %13 = vector.load %arg4[%c0_9, %c0_10] : memref<8x1xf32, #tpu.memory_space<vmem>>, vector<8x1xf32>
      tpu.vector_store %arg4[%c0_9, %c0_10], %12 {strides = array<i32>} : memref<8x1xf32, #tpu.memory_space<vmem>>, vector<8x1xf32>,
    } else {
    }
    %c0 = arith.constant 0 : index
    %c0_1 = arith.constant 0 : index
    %3 = vector.load %arg2[%c0, %c0_1] : memref<8x256xf32, #tpu.memory_space<vmem>>, vector<8x256xf32>
    %cst = arith.constant dense<0.000000e+00> : vector<8xf32>
    %4 = vector.multi_reduction <add>, %3, %cst [1] : vector<8x256xf32> to vector<8xf32>
    %5 = vector.shape_cast %4 : vector<8xf32> to vector<8x1xf32>
    %c0_2 = arith.constant 0 : index
    %c0_3 = arith.constant 0 : index
    %6 = vector.load %arg4[%c0_2, %c0_3] : memref<8x1xf32, #tpu.memory_space<vmem>>, vector<8x1xf32>
    %7 = arith.addf %6, %5 : vector<8x1xf32>
    %c0_4 = arith.constant 0 : index
    %c0_5 = arith.constant 0 : index
    %8 = vector.load %arg4[%c0_4, %c0_5] : memref<8x1xf32, #tpu.memory_space<vmem>>, vector<8x1xf32>
    tpu.vector_store %arg4[%c0_4, %c0_5], %7 {strides = array<i32>} : memref<8x1xf32, #tpu.memory_space<vmem>>, vector<8x1xf32>,
    %c0_i32_6 = arith.constant 0 : i32
    %9 = arith.cmpi eq, %arg1, %c0_i32_6 : i32
    %10 = arith.extui %9 : i1 to i32
    %c0_i32_7 = arith.constant 0 : i32
    %11 = arith.cmpi ne, %10, %c0_i32_7 : i32
    scf.if %11 {
      %c0_8 = arith.constant 0 : index
      %c0_9 = arith.constant 0 : index
      %12 = vector.load %arg4[%c0_8, %c0_9] : memref<8x1xf32, #tpu.memory_space<vmem>>, vector<8x1xf32>
      %cst_10 = arith.constant 3.906250e-03 : f32
      %13 = vector.broadcast %cst_10 : f32 to vector<8x1xf32>
      %14 = arith.mulf %12, %13 : vector<8x1xf32>
      %c0_11 = arith.constant 0 : index
      %c0_12 = arith.constant 0 : index
      %15 = vector.load %arg3[%c0_11, %c0_12] : memref<8x1xf32, #tpu.memory_space<vmem>>, vector<8x1xf32>
      tpu.vector_store %arg3[%c0_11, %c0_12], %14 {strides = array<i32>} : memref<8x1xf32, #tpu.memory_space<vmem>>, vector<8x1xf32>,
    } else {
    }
    return
  }
  func.func @transform_0(%arg0: i32, %arg1: i32) -> (i32, i32) {
    %c0_i32 = arith.constant 0 : i32
    return %arg0, %arg1 : i32, i32
  }
  func.func @transform_1(%arg0: i32, %arg1: i32) -> (i32, i32) {
    %c0_i32 = arith.constant 0 : i32
    %c0_i32_0 = arith.constant 0 : i32
    return %arg0, %c0_i32 : i32, i32
  }
}

</mosaic_0001>

<llo_original>
// kernel: tpu_custom_call.1
$region0: #{tpu_custom_call.1}
  #allocation0 [shape = 'u32[]', space=smem, size = 0x4, offset = 0x4, fixed_abs, tag = 'smem constant byte address 0x4 - core index']
  #allocation1 [shape = 'u32[144,128]{1,0:T(1,128)}', space=vmem, size = 0x12000, scoped, tag = 'internal scratch']
  #allocation2 [shape = 'f32[8,1]{1,0:T(8,128)}', space=vmem, size = 0x1000, scoped, tag = 'scratch operand']
  %s0 = inlined_call_operand.hbm [shape: f32[8,256], index: 0, kind: input, shape index: {}]
  %s1 = inlined_call_operand.vmem [shape: f32[8,1], index: 1, kind: output, shape index: {}]
  %s2 = sld [smem:[#allocation0]]
  $region26: #{tpu_custom_call.1} parent=0
    _
  %s4 = ssub.s32 1, %s2
  %s5 = scalar_select 0, %s4, %s2
  $region1: #{tpu_custom_call.1} parent=0
    #allocation3 [shape = 'u8[8192]{0}', space=vmem, size = 0x2000, scoped, tag = 'input window, operand 0, single buffered']
    #allocation4 [shape = 's32[1]{0}', space=sflag, size = 0x4, scoped, tag = 'scoped memory for tpu_custom_call.1']
    %6 = vsyncpa [#allocation4], 0
    // Predicated region
    $region2: #{tpu_custom_call.1} parent=1 // pred_check
      _
    $region3: #{tpu_custom_call.1} parent=1 // pred_check_branch
      %8 = sbr.rel (0) target = $region5
    $region4: #{tpu_custom_call.1} parent=1 // pred_region
      %s10 = ssub.s32 256, 256
      %11 = vsyncadd [#allocation4], %s10
      %s13 = sshll.u32 [#allocation3], 4
      %s14 = int_to_ptr.vmem [resolvable:$true] %s13
      %16 = dma.hbm_to_vmem [thread:$0]  %s0, 256, %s14, [#allocation4]
    $region5: #{tpu_custom_call.1} parent=1 // pred_fallthru
      _
    // Predicated region
    $region6: #{tpu_custom_call.1} parent=1 // pred_check
      _
    $region7: #{tpu_custom_call.1} parent=1 // pred_check_branch
      %18 = sbr.rel (0) target = $region9
    $region8: #{tpu_custom_call.1} parent=1 // pred_region
      %19 = dma.done [#allocation4], 256
    $region9: #{tpu_custom_call.1} parent=1 // pred_fallthru
      _
    %p20 = scmp.eq.s32.totalorder 0, 0
    // Predicated region
    $region10: #{tpu_custom_call.1} parent=1 // pred_check
      %p21 = pneg %p20
    $region11: #{tpu_custom_call.1} parent=1 // pred_check_branch
      %23 = sbr.rel (%p21) target = $region13
    $region12: #{tpu_custom_call.1} parent=1 // pred_region
      %vm24 = vcmask 7168
      %25 = vst.msk [vmem:[#allocation2] sm:$0xff] %vm24, 0.0
    $region13: #{tpu_custom_call.1} parent=1 // pred_fallthru
      _
    %v26 = vld [vmem:[#allocation3] sm:$0xff]
    %v27 = vld [vmem:[#allocation3 + $0x8] sm:$0xff]
    %v28 = vadd.f32 %v26, %v27
    %29 = vadd.xlane.f32.xlu0 %v28
    %v30 = vpop.xlane.xlu0 %29
    %v31 = vld [vmem:[#allocation2] sm:$0xff]
    %v32 = vadd.f32 %v31, %v30
    %vm33 = vcmask 7168
    %34 = vst.msk [vmem:[#allocation2] sm:$0xff] %vm33, %v32
    // Predicated region
    $region14: #{tpu_custom_call.1} parent=1 // pred_check
      %p35 = pneg %p20
    $region15: #{tpu_custom_call.1} parent=1 // pred_check_branch
      %37 = sbr.rel (%p35) target = $region17
    $region16: #{tpu_custom_call.1} parent=1 // pred_region
      %v38 = vld [vmem:[#allocation2] sm:$0xff]
      %v39 = vmul.f32 %v38, 0.00390625
      %40 = vst.msk [vmem:[%s1] sm:$0xff] %vm33, %v39
    $region17: #{tpu_custom_call.1} parent=1 // pred_fallthru
      _
    // Predicated region
    $region18: #{tpu_custom_call.1} parent=1 // pred_check
      _
    $region19: #{tpu_custom_call.1} parent=1 // pred_check_branch
      %42 = sbr.rel (0) target = $region21
    $region20: #{tpu_custom_call.1} parent=1 // pred_region
      _
    $region21: #{tpu_custom_call.1} parent=1 // pred_fallthru
      _
    // Predicated region
    $region22: #{tpu_custom_call.1} parent=1 // pred_check
      _
    $region23: #{tpu_custom_call.1} parent=1 // pred_check_branch
      %44 = sbr.rel (0) target = $region25
    $region24: #{tpu_custom_call.1} parent=1 // pred_region
      _
    $region25: #{tpu_custom_call.1} parent=1 // pred_fallthru
      _
    %45 = vsyncpa [#allocation4], 1

</llo_original>
